<compile_context>
chip_gen: v5e
topology: v5e:2x2
jax: 0.10.0
libtpu: 0.0.40
codegen_flags: <defaults>
</compile_context>

<pallas_src>
import jax
import jax.numpy as jnp
from jax.experimental import pallas as pl
from jax.experimental.pallas import tpu as pltpu

_SQRT_2_OVER_PI = 0.7978845608028654
_L_PAD = 8  # output-projection rows padded to a full sublane group


def _gelu_tanh(x):
    # tanh-approx gelu: 0.5*x*(1 + tanh(sqrt(2/pi) * x * (1 + 0.044715*x^2)))
    # ~8 VALU ops + 1 EUP tanh per element (vs ~20 ops for the erf path).
    return 0.5 * x * (1.0 + jnp.tanh(_SQRT_2_OVER_PI * x * (1.0 + 0.044715 * x * x)))


# ---------------------------------------------------------------------------
# Fused kernel: synthetic electra encoder layer + DiscriminatorMRCHead.
# Input activations are token-major (tm, D); all intermediates are feature-major
# (features, tokens) so the token axis (tm) stays on the LANE axis, and the logits
# come out as a lane-dense (8, tm) slab (unmasked full-width stores).
# Weights are stored PyTorch-Linear style, i.e. (out_features, in_features).
# ---------------------------------------------------------------------------
def electra_mrc_kernel(x_ref, weT_ref, be_ref, w1T_ref, b1_ref, w2T_ref, b2_ref, oT_ref):
    x = x_ref[...]  # (tm, D) bf16, token-major

    # synthetic "electra" body: h^T = tanh(We @ x^T + be)
    # dot_general contracts We's in_features with x's feature axis (A @ B^T on MXU),
    # producing feature-major hT directly — no explicit transpose.
    hT = jnp.tanh(
        jax.lax.dot_general(
            weT_ref[...], x,
            dimension_numbers=(((1,), (1,)), ((), ())),
            preferred_element_type=jnp.float32,
        )
        + be_ref[...]
    )  # (D, tm) f32

    # DiscriminatorMRCHead: dropout (identity) -> dense -> gelu -> dropout -> out_proj
    h1T = (
        jnp.dot(w1T_ref[...], hT.astype(jnp.bfloat16), preferred_element_type=jnp.float32)
        + b1_ref[...]
    )  # (H, tm) f32
    gT = _gelu_tanh(h1T)  # f32 activation math (portable across v5e/v6e/v7x)
    logitsT = (
        jnp.dot(w2T_ref[...], gT.astype(jnp.bfloat16), preferred_element_type=jnp.float32)
        + b2_ref[...]
    )  # (8, tm) f32 — lane-dense along the token axis, full sublane group

    oT_ref[...] = logitsT.astype(oT_ref.dtype)


def electra_mrc_logits(x, weT, be, w1T, b1, w2T_pad, b2_pad, *, tm=256):
    """x: (N, D) bf16 token-major activations. Returns (L_PAD, N) f32 logits (feature-major)."""
    N, D = x.shape
    H = w1T.shape[0]
    L_pad = w2T_pad.shape[0]

    num_tiles = -(-N // tm)          # ceil
    n_pad = num_tiles * tm
    if n_pad != N:
        x = jnp.pad(x, ((0, n_pad - N), (0, 0)))

    # Constant-index (grid-resident) blocks: single-buffer them (no overlap benefit,
    # halves their VMEM footprint — matters most on v7x's 64 MiB per-TC VMEM).
    const = lambda shape: pl.BlockSpec(shape, lambda i: (0, 0), pipeline_mode=pl.Buffered(1))

    out = pl.pallas_call(
        electra_mrc_kernel,
        out_shape=jax.ShapeDtypeStruct((L_pad, n_pad), jnp.float32),
        grid_spec=pltpu.PrefetchScalarGridSpec(
            num_scalar_prefetch=0,
            grid=(num_tiles,),
            in_specs=[
                pl.BlockSpec((tm, D), lambda i: (i, 0)),   # activations: token tiles
                const((D, D)),                             # weT   (resident, single buffer)
                const((D, 1)),                             # be
                const((H, D)),                             # w1T
                const((H, 1)),                             # b1
                const((L_pad, H)),                         # w2T (padded to 8 rows)
                const((L_pad, 1)),                         # b2
            ],
            out_specs=pl.BlockSpec((L_pad, tm), lambda i: (0, i)),  # lane-dense logits slab
        ),
        compiler_params=pltpu.CompilerParams(
            dimension_semantics=("parallel",),
            vmem_limit_bytes=48 * 1024 * 1024,   # safe on v7x (64 MiB/TC); raise on v5e/v6e if needed
        ),
    )(x, weT, be, w1T, b1, w2T_pad, b2_pad)
    return out[:, :N]


# ---------------------------------------------------------------------------
# Cross-entropy (ignore_index = seq_len) for start/end positions.
# Start and end logits are stacked to a single (2B, S) block so there is a single
# max/exp/sum reduction pass; per-loss means are kept separate to match PyTorch.
# Scalar loss is written to SMEM (no padded VMEM tile for 4 useful bytes).
# ---------------------------------------------------------------------------
def ce_loss_kernel(logits_ref, pos_ref, loss_ref):
    R, S = logits_ref.shape          # R = 2B: rows [0,B) = start, [B,2B) = end
    B = R // 2
    ignored = S                      # ignored_index = start_logits.size(1)

    logits = logits_ref[...].astype(jnp.float32)          # (2B, S)
    pos = jnp.clip(pos_ref[...], 0, ignored)              # (2B, 1) int32

    m = jnp.max(logits, axis=-1, keepdims=True)            # (2B, 1)
    lse = m + jnp.log(jnp.sum(jnp.exp(logits - m), axis=-1, keepdims=True))
    col = jax.lax.broadcasted_iota(jnp.int32, (R, S), 1)
    onehot = (col == pos).astype(jnp.float32)               # (2B, S)
    picked = jnp.sum(onehot * logits, axis=-1, keepdims=True)
    valid = (pos != ignored).astype(jnp.float32)             # (2B, 1)
    per = (lse - picked) * valid                              # (2B, 1)

    row = jax.lax.broadcasted_iota(jnp.int32, (R, 1), 0)
    is_start = (row < B).astype(jnp.float32)
    is_end = 1.0 - is_start

    # NOTE: all-ignored batch -> 0/0 -> nan, matching PyTorch CrossEntropyLoss.
    start_loss = jnp.sum(per * is_start) / jnp.sum(valid * is_start)
    end_loss = jnp.sum(per * is_end) / jnp.sum(valid * is_end)
    loss_ref[0, 0] = 0.5 * (start_loss + end_loss)


def mrc_ce_loss(start_logits, end_logits, start_positions, end_positions):
    B, S = start_logits.shape
    logits = jnp.concatenate([start_logits, end_logits], axis=0)                # (2B, S)
    pos = jnp.concatenate(
        [start_positions.reshape(-1), end_positions.reshape(-1)], axis=0
    ).reshape(2 * B, 1).astype(jnp.int32)                                        # (2B, 1)
    loss = pl.pallas_call(
        ce_loss_kernel,
        out_shape=jax.ShapeDtypeStruct((1, 1), jnp.float32),
        in_specs=[pl.BlockSpec(memory_space=pltpu.MemorySpace.VMEM)] * 2,
        out_specs=pl.BlockSpec(memory_space=pltpu.MemorySpace.SMEM),
    )(logits, pos)
    return loss[0, 0]


# ---------------------------------------------------------------------------
# Module-equivalent forward
# ---------------------------------------------------------------------------
def discriminator_mrc_forward(params, input_ids, start_positions=None, end_positions=None):
    B, S = input_ids.shape
    ids = input_ids.reshape(-1)

    # synthetic electra embedding lookup: token-major row gather on a (V, D) bf16 table
    x = jnp.take(params["embed"], ids, axis=0)              # (N, D) bf16

    logits_t = electra_mrc_logits(
        x, params["weT"], params["be"],
        params["w1T"], params["b1"], params["w2T_pad"], params["b2_pad"],
    )  # (8, N) f32, lane-dense; rows >= num_labels are padding

    # logits.split(1, dim=-1) + squeeze(-1)  ->  contiguous row slices here
    start_logits = logits_t[0].reshape(B, S)
    end_logits = logits_t[1].reshape(B, S)

    if start_positions is not None and end_positions is not None:
        sp = start_positions.reshape(-1) if start_positions.ndim > 1 else start_positions
        ep = end_positions.reshape(-1) if end_positions.ndim > 1 else end_positions
        return mrc_ce_loss(start_logits, end_logits, sp, ep)
    return start_logits, end_logits


def init_params(key, vocab, dim, num_labels):
    ks = jax.random.split(key, 4)
    hid = 4 * dim
    # Weights stored (out_features, in_features) and bf16 for the MXU; biases f32.
    w2 = 0.02 * jax.random.normal(ks[3], (num_labels, hid), jnp.float32)
    w2_pad = jnp.zeros((_L_PAD, hid), jnp.float32).at[:num_labels].set(w2)
    return {
        "embed": (0.02 * jax.random.normal(ks[0], (vocab, dim), jnp.float32)).astype(jnp.bfloat16),
        "weT": (0.02 * jax.random.normal(ks[1], (dim, dim), jnp.float32)).astype(jnp.bfloat16),
        "be": jnp.zeros((dim, 1), jnp.float32),
        "w1T": (0.02 * jax.random.normal(ks[2], (hid, dim), jnp.float32)).astype(jnp.bfloat16),
        "b1": jnp.zeros((hid, 1), jnp.float32),
        "w2T_pad": w2_pad.astype(jnp.bfloat16),
        "b2_pad": jnp.zeros((_L_PAD, 1), jnp.float32),
    }


if __name__ == "__main__":
    B, S, D, L, V = 2, 8, 32, 2, 64
    key = jax.random.PRNGKey(0)
    kp, ki = jax.random.split(key)

    params = init_params(kp, V, D, L)
    input_ids = jax.random.randint(ki, (B, S), 0, V, dtype=jnp.int32)
    start_positions = jnp.array([1, 3], dtype=jnp.int32)
    end_positions = jnp.array([4, 7], dtype=jnp.int32)

    # inference path: (start_logits, end_logits)
    start_logits, end_logits = discriminator_mrc_forward(params, input_ids)
    # training path: scalar total_loss
    total_loss = discriminator_mrc_forward(params, input_ids, start_positions, end_positions)

    jax.block_until_ready((start_logits, end_logits, total_loss))
    assert start_logits.shape == (B, S) and end_logits.shape == (B, S)
    assert total_loss.shape == ()
    assert bool(jnp.all(jnp.isfinite(start_logits))) and bool(jnp.all(jnp.isfinite(end_logits)))
    assert bool(jnp.isfinite(total_loss))
    print("KERNEL_OK")
</pallas_src>

<mosaic_0001>
module attributes {stable_mosaic.version = 11 : i64} {
  func.func @electra_mrc_kernel(%arg0: i32, %arg1: memref<256x32xbf16, #tpu.memory_space<vmem>>, %arg2: memref<32x32xbf16, #tpu.memory_space<vmem>>, %arg3: memref<32x1xf32, #tpu.memory_space<vmem>>, %arg4: memref<128x32xbf16, #tpu.memory_space<vmem>>, %arg5: memref<128x1xf32, #tpu.memory_space<vmem>>, %arg6: memref<8x128xbf16, #tpu.memory_space<vmem>>, %arg7: memref<8x1xf32, #tpu.memory_space<vmem>>, %arg8: memref<8x256xf32, #tpu.memory_space<vmem>>) attributes {dimension_semantics = [#tpu.dimension_semantics<parallel>], iteration_bounds = array<i64: 1>, scalar_prefetch = 0 : i64, scratch_operands = 0 : i64, tpu.core_type = #tpu.core_type<tc>, window_params = [{transform_indices = @transform_0, window_bounds = array<i64: 256, 32>}, {pipeline_mode = #tpu.pipeline_mode<synchronous>, transform_indices = @transform_1, window_bounds = array<i64: 32, 32>}, {pipeline_mode = #tpu.pipeline_mode<synchronous>, transform_indices = @transform_2, window_bounds = array<i64: 32, 1>}, {pipeline_mode = #tpu.pipeline_mode<synchronous>, transform_indices = @transform_3, window_bounds = array<i64: 128, 32>}, {pipeline_mode = #tpu.pipeline_mode<synchronous>, transform_indices = @transform_4, window_bounds = array<i64: 128, 1>}, {pipeline_mode = #tpu.pipeline_mode<synchronous>, transform_indices = @transform_5, window_bounds = array<i64: 8, 128>}, {pipeline_mode = #tpu.pipeline_mode<synchronous>, transform_indices = @transform_6, window_bounds = array<i64: 8, 1>}, {transform_indices = @transform_7, window_bounds = array<i64: 8, 256>}]} {
    %c0 = arith.constant 0 : index
    %c0_0 = arith.constant 0 : index
    %0 = vector.load %arg1[%c0, %c0_0] : memref<256x32xbf16, #tpu.memory_space<vmem>>, vector<256x32xbf16>
    %c0_1 = arith.constant 0 : index
    %c0_2 = arith.constant 0 : index
    %1 = vector.load %arg2[%c0_1, %c0_2] : memref<32x32xbf16, #tpu.memory_space<vmem>>, vector<32x32xbf16>
    %cst = arith.constant dense<0.000000e+00> : vector<32x256xf32>
    %2 = tpu.matmul %1, %0, %cst {dimension_numbers = #tpu.dot_dimension_numbers<[1], [1], [0], [0], [0, 0, 1, 0], [], []>} : vector<32x32xbf16>, vector<256x32xbf16>, vector<32x256xf32> -> vector<32x256xf32>
    %c0_3 = arith.constant 0 : index
    %c0_4 = arith.constant 0 : index
    %3 = vector.load %arg3[%c0_3, %c0_4] : memref<32x1xf32, #tpu.memory_space<vmem>>, vector<32x1xf32>
    %4 = vector.broadcast %3 : vector<32x1xf32> to vector<32x256xf32>
    %5 = arith.addf %2, %4 : vector<32x256xf32>
    %6 = math.tanh %5 : vector<32x256xf32>
    %c0_5 = arith.constant 0 : index
    %c0_6 = arith.constant 0 : index
    %7 = vector.load %arg4[%c0_5, %c0_6] : memref<128x32xbf16, #tpu.memory_space<vmem>>, vector<128x32xbf16>
    %8 = arith.truncf %6 : vector<32x256xf32> to vector<32x256xbf16>
    %cst_7 = arith.constant dense<0.000000e+00> : vector<128x256xf32>
    %9 = tpu.matmul %7, %8, %cst_7 {dimension_numbers = #tpu.dot_dimension_numbers<[1], [0], [0], [1], [0, 0, 1, 1], [], []>} : vector<128x32xbf16>, vector<32x256xbf16>, vector<128x256xf32> -> vector<128x256xf32>
    %c0_8 = arith.constant 0 : index
    %c0_9 = arith.constant 0 : index
    %10 = vector.load %arg5[%c0_8, %c0_9] : memref<128x1xf32, #tpu.memory_space<vmem>>, vector<128x1xf32>
    %11 = vector.broadcast %10 : vector<128x1xf32> to vector<128x256xf32>
    %12 = arith.addf %9, %11 : vector<128x256xf32>
    %cst_10 = arith.constant 5.000000e-01 : f32
    %13 = vector.broadcast %cst_10 : f32 to vector<128x256xf32>
    %14 = arith.mulf %13, %12 : vector<128x256xf32>
    %cst_11 = arith.constant 0.797884583 : f32
    %15 = vector.broadcast %cst_11 : f32 to vector<128x256xf32>
    %16 = arith.mulf %15, %12 : vector<128x256xf32>
    %cst_12 = arith.constant 4.471500e-02 : f32
    %17 = vector.broadcast %cst_12 : f32 to vector<128x256xf32>
    %18 = arith.mulf %17, %12 : vector<128x256xf32>
    %19 = arith.mulf %18, %12 : vector<128x256xf32>
    %cst_13 = arith.constant 1.000000e+00 : f32
    %20 = vector.broadcast %cst_13 : f32 to vector<128x256xf32>
    %21 = arith.addf %20, %19 : vector<128x256xf32>
    %22 = arith.mulf %16, %21 : vector<128x256xf32>
    %23 = math.tanh %22 : vector<128x256xf32>
    %cst_14 = arith.constant 1.000000e+00 : f32
    %24 = vector.broadcast %cst_14 : f32 to vector<128x256xf32>
    %25 = arith.addf %24, %23 : vector<128x256xf32>
    %26 = arith.mulf %14, %25 : vector<128x256xf32>
    %c0_15 = arith.constant 0 : index
    %c0_16 = arith.constant 0 : index
    %27 = vector.load %arg6[%c0_15, %c0_16] : memref<8x128xbf16, #tpu.memory_space<vmem>>, vector<8x128xbf16>
    %28 = arith.truncf %26 : vector<128x256xf32> to vector<128x256xbf16>
    %cst_17 = arith.constant dense<0.000000e+00> : vector<8x256xf32>
    %29 = tpu.matmul %27, %28, %cst_17 {dimension_numbers = #tpu.dot_dimension_numbers<[1], [0], [0], [1], [0, 0, 1, 1], [], []>} : vector<8x128xbf16>, vector<128x256xbf16>, vector<8x256xf32> -> vector<8x256xf32>
    %c0_18 = arith.constant 0 : index
    %c0_19 = arith.constant 0 : index
    %30 = vector.load %arg7[%c0_18, %c0_19] : memref<8x1xf32, #tpu.memory_space<vmem>>, vector<8x1xf32>
    %31 = vector.broadcast %30 : vector<8x1xf32> to vector<8x256xf32>
    %32 = arith.addf %29, %31 : vector<8x256xf32>
    %c0_20 = arith.constant 0 : index
    %c0_21 = arith.constant 0 : index
    %33 = vector.load %arg8[%c0_20, %c0_21] : memref<8x256xf32, #tpu.memory_space<vmem>>, vector<8x256xf32>
    tpu.vector_store %arg8[%c0_20, %c0_21], %32 {strides = array<i32>} : memref<8x256xf32, #tpu.memory_space<vmem>>, vector<8x256xf32>,
    return
  }
  func.func @transform_0(%arg0: i32) -> (i32, i32) {
    %c0_i32 = arith.constant 0 : i32
    %c0_i32_0 = arith.constant 0 : i32
    return %arg0, %c0_i32 : i32, i32
  }
  func.func @transform_1(%arg0: i32) -> (i32, i32) {
    %c0_i32 = arith.constant 0 : i32
    %c0_i32_0 = arith.constant 0 : i32
    %c0_i32_1 = arith.constant 0 : i32
    return %c0_i32, %c0_i32_0 : i32, i32
  }
  func.func @transform_2(%arg0: i32) -> (i32, i32) {
    %c0_i32 = arith.constant 0 : i32
    %c0_i32_0 = arith.constant 0 : i32
    %c0_i32_1 = arith.constant 0 : i32
    return %c0_i32, %c0_i32_0 : i32, i32
  }
  func.func @transform_3(%arg0: i32) -> (i32, i32) {
    %c0_i32 = arith.constant 0 : i32
    %c0_i32_0 = arith.constant 0 : i32
    %c0_i32_1 = arith.constant 0 : i32
    return %c0_i32, %c0_i32_0 : i32, i32
  }
  func.func @transform_4(%arg0: i32) -> (i32, i32) {
    %c0_i32 = arith.constant 0 : i32
    %c0_i32_0 = arith.constant 0 : i32
    %c0_i32_1 = arith.constant 0 : i32
    return %c0_i32, %c0_i32_0 : i32, i32
  }
  func.func @transform_5(%arg0: i32) -> (i32, i32) {
    %c0_i32 = arith.constant 0 : i32
    %c0_i32_0 = arith.constant 0 : i32
    %c0_i32_1 = arith.constant 0 : i32
    return %c0_i32, %c0_i32_0 : i32, i32
  }
  func.func @transform_6(%arg0: i32) -> (i32, i32) {
    %c0_i32 = arith.constant 0 : i32
    %c0_i32_0 = arith.constant 0 : i32
    %c0_i32_1 = arith.constant 0 : i32
    return %c0_i32, %c0_i32_0 : i32, i32
  }
  func.func @transform_7(%arg0: i32) -> (i32, i32) {
    %c0_i32 = arith.constant 0 : i32
    %c0_i32_0 = arith.constant 0 : i32
    return %c0_i32, %arg0 : i32, i32
  }
}

</mosaic_0001>

<llo_original>
// kernel: tpu_custom_call.1
$region0: #{tpu_custom_call.1}
  #allocation0 [shape = 'u32[]', space=smem, size = 0x4, offset = 0x4, fixed_abs, tag = 'smem constant byte address 0x4 - core index']
  #allocation1 [shape = 'u32[72,128]{1,0:T(1,128)}', space=vmem, size = 0x9000, scoped, tag = 'internal scratch']
  %s0 = inlined_call_operand.vmem [shape: bf16[256,32], index: 0, kind: input, shape index: {}]
  %s1 = inlined_call_operand.vmem [shape: bf16[32,32], index: 1, kind: input, shape index: {}]
  %s2 = inlined_call_operand.vmem [shape: f32[32,1], index: 2, kind: input, shape index: {}]
  %s3 = inlined_call_operand.vmem [shape: bf16[128,32], index: 3, kind: input, shape index: {}]
  %s4 = inlined_call_operand.vmem [shape: f32[128,1], index: 4, kind: input, shape index: {}]
  %s5 = inlined_call_operand.vmem [shape: bf16[8,128], index: 5, kind: input, shape index: {}]
  %s6 = inlined_call_operand.vmem [shape: f32[8,1], index: 6, kind: input, shape index: {}]
  %s7 = inlined_call_operand.hbm [shape: f32[8,256], index: 7, kind: output, shape index: {}]
  %s8 = sld [smem:[#allocation0]]
  $region38: #{tpu_custom_call.1} parent=0
    _
  %s10 = ssub.s32 1, %s8
  %s11 = scalar_select 0, %s10, %s8
  $region1: #{tpu_custom_call.1} parent=0
    #allocation2 [shape = 'u8[8192]{0}', space=vmem, size = 0x2000, scoped, tag = 'output window, operand 0, single buffered']
    #allocation3 [shape = 's32[1]{0}', space=sflag, size = 0x4, scoped, tag = 'scoped memory for tpu_custom_call.1']
    %12 = vsyncpa [#allocation3], 0
    // Predicated region
    $region2: #{tpu_custom_call.1} parent=1 // pred_check
      _
    $region3: #{tpu_custom_call.1} parent=1 // pred_check_branch
      %14 = sbr.rel (0) target = $region5
    $region4: #{tpu_custom_call.1} parent=1 // pred_region
      _
    $region5: #{tpu_custom_call.1} parent=1 // pred_fallthru
      _
    // Predicated region
    $region6: #{tpu_custom_call.1} parent=1 // pred_check
      _
    $region7: #{tpu_custom_call.1} parent=1 // pred_check_branch
      %16 = sbr.rel (0) target = $region9
    $region8: #{tpu_custom_call.1} parent=1 // pred_region
      _
    $region9: #{tpu_custom_call.1} parent=1 // pred_fallthru
      _
    // Predicated region
    $region10: #{tpu_custom_call.1} parent=1 // pred_check
      _
    $region11: #{tpu_custom_call.1} parent=1 // pred_check_branch
      %18 = sbr.rel (0) target = $region13
    $region12: #{tpu_custom_call.1} parent=1 // pred_region
      _
    $region13: #{tpu_custom_call.1} parent=1 // pred_fallthru
      _
    // Predicated region
    $region14: #{tpu_custom_call.1} parent=1 // pred_check
      _
    $region15: #{tpu_custom_call.1} parent=1 // pred_check_branch
      %20 = sbr.rel (0) target = $region17
    $region16: #{tpu_custom_call.1} parent=1 // pred_region
      _
    $region17: #{tpu_custom_call.1} parent=1 // pred_fallthru
      _
    // Predicated region
    $region18: #{tpu_custom_call.1} parent=1 // pred_check
      _
    $region19: #{tpu_custom_call.1} parent=1 // pred_check_branch
      %22 = sbr.rel (0) target = $region21
    $region20: #{tpu_custom_call.1} parent=1 // pred_region
      _
    $region21: #{tpu_custom_call.1} parent=1 // pred_fallthru
      _
    // Predicated region
    $region22: #{tpu_custom_call.1} parent=1 // pred_check
      _
    $region23: #{tpu_custom_call.1} parent=1 // pred_check_branch
      %24 = sbr.rel (0) target = $region25
    $region24: #{tpu_custom_call.1} parent=1 // pred_region
      _
    $region25: #{tpu_custom_call.1} parent=1 // pred_fallthru
      _
    // Predicated region
    $region26: #{tpu_custom_call.1} parent=1 // pred_check
      _
    $region27: #{tpu_custom_call.1} parent=1 // pred_check_branch
      %26 = sbr.rel (0) target = $region29
    $region28: #{tpu_custom_call.1} parent=1 // pred_region
      _
    $region29: #{tpu_custom_call.1} parent=1 // pred_fallthru
      _
    %v28 = vld [vmem:[%s0] sm:$0xf]
    %v29 = vld [vmem:[%s0 + $0x4] sm:$0xf]
    %v30 = vld [vmem:[%s0 + $0x8] sm:$0xf]
    %v31 = vld [vmem:[%s0 + $0xc] sm:$0xf]
    %v32 = vld [vmem:[%s0 + $0x10] sm:$0xf]
    %v33 = vld [vmem:[%s0 + $0x14] sm:$0xf]
    %v34 = vld [vmem:[%s0 + $0x18] sm:$0xf]
    %v35 = vld [vmem:[%s0 + $0x1c] sm:$0xf]
    %v36 = vld [vmem:[%s0 + $0x20] sm:$0xf]
    %v37 = vld [vmem:[%s0 + $0x24] sm:$0xf]
    %v38 = vld [vmem:[%s0 + $0x28] sm:$0xf]
    %v39 = vld [vmem:[%s0 + $0x2c] sm:$0xf]
    %v40 = vld [vmem:[%s0 + $0x30] sm:$0xf]
    %v41 = vld [vmem:[%s0 + $0x34] sm:$0xf]
    %v42 = vld [vmem:[%s0 + $0x38] sm:$0xf]
    %v43 = vld [vmem:[%s0 + $0x3c] sm:$0xf]
    %v44 = vld [vmem:[%s0 + $0x40] sm:$0xf]
    %v45 = vld [vmem:[%s0 + $0x44] sm:$0xf]
    %v46 = vld [vmem:[%s0 + $0x48] sm:$0xf]
    %v47 = vld [vmem:[%s0 + $0x4c] sm:$0xf]
    %v48 = vld [vmem:[%s0 + $0x50] sm:$0xf]
    %v49 = vld [vmem:[%s0 + $0x54] sm:$0xf]
    %v50 = vld [vmem:[%s0 + $0x58] sm:$0xf]
    %v51 = vld [vmem:[%s0 + $0x5c] sm:$0xf]
    %v52 = vld [vmem:[%s0 + $0x60] sm:$0xf]
    %v53 = vld [vmem:[%s0 + $0x64] sm:$0xf]
    %v54 = vld [vmem:[%s0 + $0x68] sm:$0xf]
    %v55 = vld [vmem:[%s0 + $0x6c] sm:$0xf]
    %v56 = vld [vmem:[%s0 + $0x70] sm:$0xf]
    %v57 = vld [vmem:[%s0 + $0x74] sm:$0xf]
    %v58 = vld [vmem:[%s0 + $0x78] sm:$0xf]
    %v59 = vld [vmem:[%s0 + $0x7c] sm:$0xf]
    %v60 = vld [vmem:[%s1] sm:$0xf]
    %v61 = vld [vmem:[%s1 + $0x4] sm:$0xf]
    %v62 = vld [vmem:[%s1 + $0x8] sm:$0xf]
    %v63 = vld [vmem:[%s1 + $0xc] sm:$0xf]
    %v64 = vld [vmem:[%s2] sm:$0xff]
    %v65 = vld [vmem:[%s2 + $0x8] sm:$0xff]
    %v66 = vld [vmem:[%s2 + $0x10] sm:$0xff]
    %v67 = vld [vmem:[%s2 + $0x18] sm:$0xff]
    %69 = vset.pattern.permute.xlu0 0
    %70 = vperm.xlu0 %69, %v64
    %v71 = vpop.permute.xlu0 %70
    %74 = vset.pattern.permute.xlu0 0
    %75 = vperm.xlu0 %74, %v65
    %v76 = vpop.permute.xlu0 %75
    %79 = vset.pattern.permute.xlu0 0
    %80 = vperm.xlu0 %79, %v66
    %v81 = vpop.permute.xlu0 %80
    %84 = vset.pattern.permute.xlu0 0
    %85 = vperm.xlu0 %84, %v67
    %v86 = vpop.permute.xlu0 %85
    %v92 = vunpack.c.l.b16 %v60
    %v93 = vunpack.c.l.b16 %v61
    %v94 = vunpack.c.l.b16 %v62
    %v95 = vunpack.c.l.b16 %v63
    %v96 = vpack.c.b16 %v93, %v92
    %v97 = vpack.c.b16 %v95, %v94
    %v130 = vunpack.c.l.b16 %v28
    %v131 = vunpack.c.l.b16 %v29
    %v132 = vunpack.c.l.b16 %v30
    %v133 = vunpack.c.l.b16 %v31
    %v134 = vunpack.c.l.b16 %v32
    %v135 = vunpack.c.l.b16 %v33
    %v136 = vunpack.c.l.b16 %v34
    %v137 = vunpack.c.l.b16 %v35
    %v138 = vunpack.c.l.b16 %v36
    %v139 = vunpack.c.l.b16 %v37
    %v140 = vunpack.c.l.b16 %v38
    %v141 = vunpack.c.l.b16 %v39
    %v142 = vunpack.c.l.b16 %v40
    %v143 = vunpack.c.l.b16 %v41
    %v144 = vunpack.c.l.b16 %v42
    %v145 = vunpack.c.l.b16 %v43
    %v146 = vunpack.c.l.b16 %v44
    %v147 = vunpack.c.l.b16 %v45
    %v148 = vunpack.c.l.b16 %v46
    %v149 = vunpack.c.l.b16 %v47
    %v150 = vunpack.c.l.b16 %v48
    %v151 = vunpack.c.l.b16 %v49
    %v152 = vunpack.c.l.b16 %v50
    %v153 = vunpack.c.l.b16 %v51
    %v154 = vunpack.c.l.b16 %v52
    %v155 = vunpack.c.l.b16 %v53
    %v156 = vunpack.c.l.b16 %v54
    %v157 = vunpack.c.l.b16 %v55
    %v158 = vunpack.c.l.b16 %v56
    %v159 = vunpack.c.l.b16 %v57
    %v160 = vunpack.c.l.b16 %v58
    %v161 = vunpack.c.l.b16 %v59
    %v162 = vpack.c.b16 %v131, %v130
    %v163 = vpack.c.b16 %v133, %v132
    %v164 = vpack.c.b16 %v135, %v134
    %v165 = vpack.c.b16 %v137, %v136
    %v166 = vpack.c.b16 %v139, %v138
    %v167 = vpack.c.b16 %v141, %v140
    %v168 = vpack.c.b16 %v143, %v142
    %v169 = vpack.c.b16 %v145, %v144
    %v170 = vpack.c.b16 %v147, %v146
    %v171 = vpack.c.b16 %v149, %v148
    %v172 = vpack.c.b16 %v151, %v150
    %v173 = vpack.c.b16 %v153, %v152
    %v174 = vpack.c.b16 %v155, %v154
    %v175 = vpack.c.b16 %v157, %v156
    %v176 = vpack.c.b16 %v159, %v158
    %v177 = vpack.c.b16 %v161, %v160
    %vm178 = vcmask 261120
    %v180 = vsel %vm178, %v96, 0
    %v183 = vsel %vm178, %v97, 0
    %v186 = vsel %vm178, %v162, 0
    %v189 = vsel %vm178, %v163, 0
    %v192 = vsel %vm178, %v164, 0
    %v195 = vsel %vm178, %v165, 0
    %v198 = vsel %vm178, %v166, 0
    %v201 = vsel %vm178, %v167, 0
    %v204 = vsel %vm178, %v168, 0
    %v207 = vsel %vm178, %v169, 0
    %v210 = vsel %vm178, %v170, 0
    %v213 = vsel %vm178, %v171, 0
    %v216 = vsel %vm178, %v172, 0
    %v219 = vsel %vm178, %v173, 0
    %v222 = vsel %vm178, %v174, 0
    %v225 = vsel %vm178, %v175, 0
    %v228 = vsel %vm178, %v176, 0
    %v231 = vsel %vm178, %v177, 0
    %233 = vmatpush.bf16.xpose.msra.mxu0 %v207
    %234 = vmatpush.bf16.xpose.msra.mxu0 %v204
    %235 = vmatpush.bf16.xpose.msra.mxu0 %v201
    %236 = vmatpush.bf16.xpose.msra.mxu0 %v198
    %237 = vmatpush.bf16.xpose.msra.mxu0 %v195
    %238 = vmatpush.bf16.xpose.msra.mxu0 %v192
    %239 = vmatpush.bf16.xpose.msra.mxu0 %v189
    %240 = vmatpush.bf16.xpose.msra.mxu0 %v186
    %241 = vmatmul.bf16.gmra.mxu0 %v180
    %v242 = vpop.f32.mrf.mxu0
    %v243 = vadd.f32 %v71, %v242
    %v244 = vpop.f32.mrf.mxu0
    %v245 = vadd.f32 %v76, %v244
    %246 = vmatmul.bf16.gmra.mxu0 %v183
    %v247 = vpop.f32.mrf.mxu0
    %v248 = vadd.f32 %v81, %v247
    %v249 = vpop.f32.mrf.mxu0
    %v250 = vadd.f32 %v86, %v249
    %251 = vdwg.mxu0
    %252 = vmatpush.bf16.xpose.msra.mxu0 %v231
    %253 = vmatpush.bf16.xpose.msra.mxu0 %v228
    %254 = vmatpush.bf16.xpose.msra.mxu0 %v225
    %255 = vmatpush.bf16.xpose.msra.mxu0 %v222
    %256 = vmatpush.bf16.xpose.msra.mxu0 %v219
    %257 = vmatpush.bf16.xpose.msra.mxu0 %v216
    %258 = vmatpush.bf16.xpose.msra.mxu0 %v213
    %259 = vmatpush.bf16.xpose.msra.mxu0 %v210
    %260 = vmatmul.bf16.gmra.mxu0 %v180
    %v261 = vpop.f32.mrf.mxu0
    %v262 = vadd.f32 %v71, %v261
    %v263 = vpop.f32.mrf.mxu0
    %v264 = vadd.f32 %v76, %v263
    %265 = vmatmul.bf16.gmra.mxu0 %v183
    %v266 = vpop.f32.mrf.mxu0
    %v267 = vadd.f32 %v81, %v266
    %v268 = vpop.f32.mrf.mxu0
    %v269 = vadd.f32 %v86, %v268
    %270 = vdwg.mxu0
    %v271 = vtanh.pop %v243
    %v272 = vtanh.pop %v262
    %v273 = vtanh.pop %v245
    %v274 = vtanh.pop %v264
    %v275 = vtanh.pop %v248
    %v276 = vtanh.pop %v267
    %v277 = vtanh.pop %v250
    %v278 = vtanh.pop %v269
    %v279 = vld [vmem:[%s3] sm:$0xf]
    %v280 = vld [vmem:[%s3 + $0x4] sm:$0xf]
    %v281 = vld [vmem:[%s3 + $0x8] sm:$0xf]
    %v282 = vld [vmem:[%s3 + $0xc] sm:$0xf]
    %v283 = vld [vmem:[%s3 + $0x10] sm:$0xf]
    %v284 = vld [vmem:[%s3 + $0x14] sm:$0xf]
    %v285 = vld [vmem:[%s3 + $0x18] sm:$0xf]
    %v286 = vld [vmem:[%s3 + $0x1c] sm:$0xf]
    %v287 = vld [vmem:[%s3 + $0x20] sm:$0xf]
    %v288 = vld [vmem:[%s3 + $0x24] sm:$0xf]
    %v289 = vld [vmem:[%s3 + $0x28] sm:$0xf]
    %v290 = vld [vmem:[%s3 + $0x2c] sm:$0xf]
    %v291 = vld [vmem:[%s3 + $0x30] sm:$0xf]
    %v292 = vld [vmem:[%s3 + $0x34] sm:$0xf]
    %v293 = vld [vmem:[%s3 + $0x38] sm:$0xf]
    %v294 = vld [vmem:[%s3 + $0x3c] sm:$0xf]
    %v295 = vpack.c.bf16 %v273, %v271
    %v296 = vpack.c.bf16 %v274, %v272
    %v297 = vpack.c.bf16 %v277, %v275
    %v298 = vpack.c.bf16 %v278, %v276
    %v299 = vld [vmem:[%s4] sm:$0xff]
    %v300 = vld [vmem:[%s4 + $0x8] sm:$0xff]
    %v301 = vld [vmem:[%s4 + $0x10] sm:$0xff]
    %v302 = vld [vmem:[%s4 + $0x18] sm:$0xff]
    %v303 = vld [vmem:[%s4 + $0x20] sm:$0xff]
    %v304 = vld [vmem:[%s4 + $0x28] sm:$0xff]
    %v305 = vld [vmem:[%s4 + $0x30] sm:$0xff]
    %v306 = vld [vmem:[%s4 + $0x38] sm:$0xff]
    %v307 = vld [vmem:[%s4 + $0x40] sm:$0xff]
    %v308 = vld [vmem:[%s4 + $0x48] sm:$0xff]
    %v309 = vld [vmem:[%s4 + $0x50] sm:$0xff]
    %v310 = vld [vmem:[%s4 + $0x58] sm:$0xff]
    %v311 = vld [vmem:[%s4 + $0x60] sm:$0xff]
    %v312 = vld [vmem:[%s4 + $0x68] sm:$0xff]
    %v313 = vld [vmem:[%s4 + $0x70] sm:$0xff]
    %v314 = vld [vmem:[%s4 + $0x78] sm:$0xff]
    %316 = vset.pattern.permute.xlu0 0
    %317 = vperm.xlu0 %316, %v299
    %v318 = vpop.permute.xlu0 %317
    %321 = vset.pattern.permute.xlu0 0
    %322 = vperm.xlu0 %321, %v300
    %v323 = vpop.permute.xlu0 %322
    %326 = vset.pattern.permute.xlu0 0
    %327 = vperm.xlu0 %326, %v301
    %v328 = vpop.permute.xlu0 %327
    %331 = vset.pattern.permute.xlu0 0
    %332 = vperm.xlu0 %331, %v302
    %v333 = vpop.permute.xlu0 %332
    %336 = vset.pattern.permute.xlu0 0
    %337 = vperm.xlu0 %336, %v303
    %v338 = vpop.permute.xlu0 %337
    %341 = vset.pattern.permute.xlu0 0
    %342 = vperm.xlu0 %341, %v304
    %v343 = vpop.permute.xlu0 %342
    %346 = vset.pattern.permute.xlu0 0
    %347 = vperm.xlu0 %346, %v305
    %v348 = vpop.permute.xlu0 %347
    %351 = vset.pattern.permute.xlu0 0
    %352 = vperm.xlu0 %351, %v306
    %v353 = vpop.permute.xlu0 %352
    %356 = vset.pattern.permute.xlu0 0
    %357 = vperm.xlu0 %356, %v307
    %v358 = vpop.permute.xlu0 %357
    %361 = vset.pattern.permute.xlu0 0
    %362 = vperm.xlu0 %361, %v308
    %v363 = vpop.permute.xlu0 %362
    %366 = vset.pattern.permute.xlu0 0
    %367 = vperm.xlu0 %366, %v309
    %v368 = vpop.permute.xlu0 %367
    %371 = vset.pattern.permute.xlu0 0
    %372 = vperm.xlu0 %371, %v310
    %v373 = vpop.permute.xlu0 %372
    %376 = vset.pattern.permute.xlu0 0
    %377 = vperm.xlu0 %376, %v311
    %v378 = vpop.permute.xlu0 %377
    %381 = vset.pattern.permute.xlu0 0
    %382 = vperm.xlu0 %381, %v312
    %v383 = vpop.permute.xlu0 %382
    %386 = vset.pattern.permute.xlu0 0
    %387 = vperm.xlu0 %386, %v313
    %v388 = vpop.permute.xlu0 %387
    %391 = vset.pattern.permute.xlu0 0
    %392 = vperm.xlu0 %391, %v314
    %v393 = vpop.permute.xlu0 %392
    %v411 = vunpack.c.l.b16 %v279
    %v412 = vunpack.c.l.b16 %v280
    %v413 = vunpack.c.l.b16 %v281
    %v414 = vunpack.c.l.b16 %v282
    %v415 = vunpack.c.l.b16 %v283
    %v416 = vunpack.c.l.b16 %v284
    %v417 = vunpack.c.l.b16 %v285
    %v418 = vunpack.c.l.b16 %v286
    %v419 = vunpack.c.l.b16 %v287
    %v420 = vunpack.c.l.b16 %v288
    %v421 = vunpack.c.l.b16 %v289
    %v422 = vunpack.c.l.b16 %v290
    %v423 = vunpack.c.l.b16 %v291
    %v424 = vunpack.c.l.b16 %v292
    %v425 = vunpack.c.l.b16 %v293
    %v426 = vunpack.c.l.b16 %v294
    %v427 = vpack.c.b16 %v412, %v411
    %v428 = vpack.c.b16 %v414, %v413
    %v429 = vpack.c.b16 %v416, %v415
    %v430 = vpack.c.b16 %v418, %v417
    %v431 = vpack.c.b16 %v420, %v419
    %v432 = vpack.c.b16 %v422, %v421
    %v433 = vpack.c.b16 %v424, %v423
    %v434 = vpack.c.b16 %v426, %v425
    %v436 = vsel %vm178, %v427, 0
    %v439 = vsel %vm178, %v428, 0
    %v442 = vsel %vm178, %v429, 0
    %v445 = vsel %vm178, %v430, 0
    %v448 = vsel %vm178, %v431, 0
    %v451 = vsel %vm178, %v432, 0
    %v454 = vsel %vm178, %v433, 0
    %v457 = vsel %vm178, %v434, 0
    %459 = vmatpush.bf16.msra.mxu0 0
    %460 = vmatpush.bf16.msra.mxu0 0
    %461 = vmatpush.bf16.msra.mxu0 0
    %462 = vmatpush.bf16.msra.mxu0 0
    %463 = vmatpush.bf16.msra.mxu0 0
    %464 = vmatpush.bf16.msra.mxu0 0
    %465 = vmatpush.bf16.msra.mxu0 %v297
    %466 = vmatpush.bf16.msra.mxu0 %v295
    %467 = vmatmul.bf16.gmra.mxu0 %v436
    %v468 = vpop.f32.mrf.mxu0
    %v469 = vadd.f32 %v318, %v468
    %v470 = vpop.f32.mrf.mxu0
    %v471 = vadd.f32 %v323, %v470
    %472 = vmatmul.bf16.gmra.mxu0 %v439
    %v473 = vpop.f32.mrf.mxu0
    %v474 = vadd.f32 %v328, %v473
    %v475 = vpop.f32.mrf.mxu0
    %v476 = vadd.f32 %v333, %v475
    %477 = vmatmul.bf16.gmra.mxu0 %v442
    %v478 = vpop.f32.mrf.mxu0
    %v479 = vadd.f32 %v338, %v478
    %v480 = vpop.f32.mrf.mxu0
    %v481 = vadd.f32 %v343, %v480
    %482 = vmatmul.bf16.gmra.mxu0 %v445
    %v483 = vpop.f32.mrf.mxu0
    %v484 = vadd.f32 %v348, %v483
    %v485 = vpop.f32.mrf.mxu0
    %v486 = vadd.f32 %v353, %v485
    %487 = vmatmul.bf16.gmra.mxu0 %v448
    %v488 = vpop.f32.mrf.mxu0
    %v489 = vadd.f32 %v358, %v488
    %v490 = vpop.f32.mrf.mxu0
    %v491 = vadd.f32 %v363, %v490
    %492 = vmatmul.bf16.gmra.mxu0 %v451
    %v493 = vpop.f32.mrf.mxu0
    %v494 = vadd.f32 %v368, %v493
    %v495 = vpop.f32.mrf.mxu0
    %v496 = vadd.f32 %v373, %v495
    %497 = vmatmul.bf16.gmra.mxu0 %v454
    %v498 = vpop.f32.mrf.mxu0
    %v499 = vadd.f32 %v378, %v498
    %v500 = vpop.f32.mrf.mxu0
    %v501 = vadd.f32 %v383, %v500
    %502 = vmatmul.bf16.gmra.mxu0 %v457
    %v503 = vpop.f32.mrf.mxu0
    %v504 = vadd.f32 %v388, %v503
    %v505 = vpop.f32.mrf.mxu0
    %v506 = vadd.f32 %v393, %v505
    %507 = vdwg.mxu0
    %508 = vmatpush.bf16.msra.mxu0 0
    %509 = vmatpush.bf16.msra.mxu0 0
    %510 = vmatpush.bf16.msra.mxu0 0
    %511 = vmatpush.bf16.msra.mxu0 0
    %512 = vmatpush.bf16.msra.mxu0 0
    %513 = vmatpush.bf16.msra.mxu0 0
    %514 = vmatpush.bf16.msra.mxu0 %v298
    %515 = vmatpush.bf16.msra.mxu0 %v296
    %516 = vmatmul.bf16.gmra.mxu0 %v436
    %v517 = vpop.f32.mrf.mxu0
    %v518 = vadd.f32 %v318, %v517
    %v519 = vpop.f32.mrf.mxu0
    %v520 = vadd.f32 %v323, %v519
    %521 = vmatmul.bf16.gmra.mxu0 %v439
    %v522 = vpop.f32.mrf.mxu0
    %v523 = vadd.f32 %v328, %v522
    %v524 = vpop.f32.mrf.mxu0
    %v525 = vadd.f32 %v333, %v524
    %526 = vmatmul.bf16.gmra.mxu0 %v442
    %v527 = vpop.f32.mrf.mxu0
    %v528 = vadd.f32 %v338, %v527
    %v529 = vpop.f32.mrf.mxu0
    %v530 = vadd.f32 %v343, %v529
    %531 = vmatmul.bf16.gmra.mxu0 %v445
    %v532 = vpop.f32.mrf.mxu0
    %v533 = vadd.f32 %v348, %v532
    %v534 = vpop.f32.mrf.mxu0
    %v535 = vadd.f32 %v353, %v534
    %536 = vmatmul.bf16.gmra.mxu0 %v448
    %v537 = vpop.f32.mrf.mxu0
    %v538 = vadd.f32 %v358, %v537
    %v539 = vpop.f32.mrf.mxu0
    %v540 = vadd.f32 %v363, %v539
    %541 = vmatmul.bf16.gmra.mxu0 %v451
    %v542 = vpop.f32.mrf.mxu0
    %v543 = vadd.f32 %v368, %v542
    %v544 = vpop.f32.mrf.mxu0
    %v545 = vadd.f32 %v373, %v544
    %546 = vmatmul.bf16.gmra.mxu0 %v454
    %v547 = vpop.f32.mrf.mxu0
    %v548 = vadd.f32 %v378, %v547
    %v549 = vpop.f32.mrf.mxu0
    %v550 = vadd.f32 %v383, %v549
    %551 = vmatmul.bf16.gmra.mxu0 %v457
    %v552 = vpop.f32.mrf.mxu0
    %v553 = vadd.f32 %v388, %v552
    %v554 = vpop.f32.mrf.mxu0
    %v555 = vadd.f32 %v393, %v554
    %556 = vdwg.mxu0
    %v557 = vmul.f32 %v469, 0.5
    %v558 = vmul.f32 %v518, 0.5
    %v559 = vmul.f32 %v471, 0.5
    %v560 = vmul.f32 %v520, 0.5
    %v561 = vmul.f32 %v474, 0.5
    %v562 = vmul.f32 %v523, 0.5
    %v563 = vmul.f32 %v476, 0.5
    %v564 = vmul.f32 %v525, 0.5
    %v565 = vmul.f32 %v479, 0.5
    %v566 = vmul.f32 %v528, 0.5
    %v567 = vmul.f32 %v481, 0.5
    %v568 = vmul.f32 %v530, 0.5
    %v569 = vmul.f32 %v484, 0.5
    %v570 = vmul.f32 %v533, 0.5
    %v571 = vmul.f32 %v486, 0.5
    %v572 = vmul.f32 %v535, 0.5
    %v573 = vmul.f32 %v489, 0.5
    %v574 = vmul.f32 %v538, 0.5
    %v575 = vmul.f32 %v491, 0.5
    %v576 = vmul.f32 %v540, 0.5
    %v577 = vmul.f32 %v494, 0.5
    %v578 = vmul.f32 %v543, 0.5
    %v579 = vmul.f32 %v496, 0.5
    %v580 = vmul.f32 %v545, 0.5
    %v581 = vmul.f32 %v499, 0.5
    %v582 = vmul.f32 %v548, 0.5
    %v583 = vmul.f32 %v501, 0.5
    %v584 = vmul.f32 %v550, 0.5
    %v585 = vmul.f32 %v504, 0.5
    %v586 = vmul.f32 %v553, 0.5
    %v587 = vmul.f32 %v506, 0.5
    %v588 = vmul.f32 %v555, 0.5
    %v589 = vmul.f32 %v469, 0.7978846
    %v590 = vmul.f32 %v518, 0.7978846
    %v591 = vmul.f32 %v471, 0.7978846
    %v592 = vmul.f32 %v520, 0.7978846
    %v593 = vmul.f32 %v474, 0.7978846
    %v594 = vmul.f32 %v523, 0.7978846
    %v595 = vmul.f32 %v476, 0.7978846
    %v596 = vmul.f32 %v525, 0.7978846
    %v597 = vmul.f32 %v479, 0.7978846
    %v598 = vmul.f32 %v528, 0.7978846
    %v599 = vmul.f32 %v481, 0.7978846
    %v600 = vmul.f32 %v530, 0.7978846
    %v601 = vmul.f32 %v484, 0.7978846
    %v602 = vmul.f32 %v533, 0.7978846
    %v603 = vmul.f32 %v486, 0.7978846
    %v604 = vmul.f32 %v535, 0.7978846
    %v605 = vmul.f32 %v489, 0.7978846
    %v606 = vmul.f32 %v538, 0.7978846
    %v607 = vmul.f32 %v491, 0.7978846
    %v608 = vmul.f32 %v540, 0.7978846
    %v609 = vmul.f32 %v494, 0.7978846
    %v610 = vmul.f32 %v543, 0.7978846
    %v611 = vmul.f32 %v496, 0.7978846
    %v612 = vmul.f32 %v545, 0.7978846
    %v613 = vmul.f32 %v499, 0.7978846
    %v614 = vmul.f32 %v548, 0.7978846
    %v615 = vmul.f32 %v501, 0.7978846
    %v616 = vmul.f32 %v550, 0.7978846
    %v617 = vmul.f32 %v504, 0.7978846
    %v618 = vmul.f32 %v553, 0.7978846
    %v619 = vmul.f32 %v506, 0.7978846
    %v620 = vmul.f32 %v555, 0.7978846
    %v621 = vmul.f32 %v469, 0.044715
    %v622 = vmul.f32 %v518, 0.044715
    %v623 = vmul.f32 %v471, 0.044715
    %v624 = vmul.f32 %v520, 0.044715
    %v625 = vmul.f32 %v474, 0.044715
    %v626 = vmul.f32 %v523, 0.044715
    %v627 = vmul.f32 %v476, 0.044715
    %v628 = vmul.f32 %v525, 0.044715
    %v629 = vmul.f32 %v479, 0.044715
    %v630 = vmul.f32 %v528, 0.044715
    %v631 = vmul.f32 %v481, 0.044715
    %v632 = vmul.f32 %v530, 0.044715
    %v633 = vmul.f32 %v484, 0.044715
    %v634 = vmul.f32 %v533, 0.044715
    %v635 = vmul.f32 %v486, 0.044715
    %v636 = vmul.f32 %v535, 0.044715
    %v637 = vmul.f32 %v489, 0.044715
    %v638 = vmul.f32 %v538, 0.044715
    %v639 = vmul.f32 %v491, 0.044715
    %v640 = vmul.f32 %v540, 0.044715
    %v641 = vmul.f32 %v494, 0.044715
    %v642 = vmul.f32 %v543, 0.044715
    %v643 = vmul.f32 %v496, 0.044715
    %v644 = vmul.f32 %v545, 0.044715
    %v645 = vmul.f32 %v499, 0.044715
    %v646 = vmul.f32 %v548, 0.044715
    %v647 = vmul.f32 %v501, 0.044715
    %v648 = vmul.f32 %v550, 0.044715
    %v649 = vmul.f32 %v504, 0.044715
    %v650 = vmul.f32 %v553, 0.044715
    %v651 = vmul.f32 %v506, 0.044715
    %v652 = vmul.f32 %v555, 0.044715
    %v653 = vmul.f32 %v621, %v469
    %v654 = vmul.f32 %v622, %v518
    %v655 = vmul.f32 %v623, %v471
    %v656 = vmul.f32 %v624, %v520
    %v657 = vmul.f32 %v625, %v474
    %v658 = vmul.f32 %v626, %v523
    %v659 = vmul.f32 %v627, %v476
    %v660 = vmul.f32 %v628, %v525
    %v661 = vmul.f32 %v629, %v479
    %v662 = vmul.f32 %v630, %v528
    %v663 = vmul.f32 %v631, %v481
    %v664 = vmul.f32 %v632, %v530
    %v665 = vmul.f32 %v633, %v484
    %v666 = vmul.f32 %v634, %v533
    %v667 = vmul.f32 %v635, %v486
    %v668 = vmul.f32 %v636, %v535
    %v669 = vmul.f32 %v637, %v489
    %v670 = vmul.f32 %v638, %v538
    %v671 = vmul.f32 %v639, %v491
    %v672 = vmul.f32 %v640, %v540
    %v673 = vmul.f32 %v641, %v494
    %v674 = vmul.f32 %v642, %v543
    %v675 = vmul.f32 %v643, %v496
    %v676 = vmul.f32 %v644, %v545
    %v677 = vmul.f32 %v645, %v499
    %v678 = vmul.f32 %v646, %v548
    %v679 = vmul.f32 %v647, %v501
    %v680 = vmul.f32 %v648, %v550
    %v681 = vmul.f32 %v649, %v504
    %v682 = vmul.f32 %v650, %v553
    %v683 = vmul.f32 %v651, %v506
    %v684 = vmul.f32 %v652, %v555
    %v685 = vadd.f32 %v653, 1.0
    %v686 = vadd.f32 %v654, 1.0
    %v687 = vadd.f32 %v655, 1.0
    %v688 = vadd.f32 %v656, 1.0
    %v689 = vadd.f32 %v657, 1.0
    %v690 = vadd.f32 %v658, 1.0
    %v691 = vadd.f32 %v659, 1.0
    %v692 = vadd.f32 %v660, 1.0
    %v693 = vadd.f32 %v661, 1.0
    %v694 = vadd.f32 %v662, 1.0
    %v695 = vadd.f32 %v663, 1.0
    %v696 = vadd.f32 %v664, 1.0
    %v697 = vadd.f32 %v665, 1.0
    %v698 = vadd.f32 %v666, 1.0
    %v699 = vadd.f32 %v667, 1.0
    %v700 = vadd.f32 %v668, 1.0
    %v701 = vadd.f32 %v669, 1.0
    %v702 = vadd.f32 %v670, 1.0
    %v703 = vadd.f32 %v671, 1.0
    %v704 = vadd.f32 %v672, 1.0
    %v705 = vadd.f32 %v673, 1.0
    %v706 = vadd.f32 %v674, 1.0
    %v707 = vadd.f32 %v675, 1.0
    %v708 = vadd.f32 %v676, 1.0
    %v709 = vadd.f32 %v677, 1.0
    %v710 = vadd.f32 %v678, 1.0
    %v711 = vadd.f32 %v679, 1.0
    %v712 = vadd.f32 %v680, 1.0
    %v713 = vadd.f32 %v681, 1.0
    %v714 = vadd.f32 %v682, 1.0
    %v715 = vadd.f32 %v683, 1.0
    %v716 = vadd.f32 %v684, 1.0
    %v717 = vmul.f32 %v589, %v685
    %v718 = vmul.f32 %v590, %v686
    %v719 = vmul.f32 %v591, %v687
    %v720 = vmul.f32 %v592, %v688
    %v721 = vmul.f32 %v593, %v689
    %v722 = vmul.f32 %v594, %v690
    %v723 = vmul.f32 %v595, %v691
    %v724 = vmul.f32 %v596, %v692
    %v725 = vmul.f32 %v597, %v693
    %v726 = vmul.f32 %v598, %v694
    %v727 = vmul.f32 %v599, %v695
    %v728 = vmul.f32 %v600, %v696
    %v729 = vmul.f32 %v601, %v697
    %v730 = vmul.f32 %v602, %v698
    %v731 = vmul.f32 %v603, %v699
    %v732 = vmul.f32 %v604, %v700
    %v733 = vmul.f32 %v605, %v701
    %v734 = vmul.f32 %v606, %v702
    %v735 = vmul.f32 %v607, %v703
    %v736 = vmul.f32 %v608, %v704
    %v737 = vmul.f32 %v609, %v705
    %v738 = vmul.f32 %v610, %v706
    %v739 = vmul.f32 %v611, %v707
    %v740 = vmul.f32 %v612, %v708
    %v741 = vmul.f32 %v613, %v709
    %v742 = vmul.f32 %v614, %v710
    %v743 = vmul.f32 %v615, %v711
    %v744 = vmul.f32 %v616, %v712
    %v745 = vmul.f32 %v617, %v713
    %v746 = vmul.f32 %v618, %v714
    %v747 = vmul.f32 %v619, %v715
    %v748 = vmul.f32 %v620, %v716
    %v749 = vtanh.pop %v717
    %v750 = vtanh.pop %v718
    %v751 = vtanh.pop %v719
    %v752 = vtanh.pop %v720
    %v753 = vtanh.pop %v721
    %v754 = vtanh.pop %v722
    %v755 = vtanh.pop %v723
    %v756 = vtanh.pop %v724
    %v757 = vtanh.pop %v725
    %v758 = vtanh.pop %v726
    %v759 = vtanh.pop %v727
    %v760 = vtanh.pop %v728
    %v761 = vtanh.pop %v729
    %v762 = vtanh.pop %v730
    %v763 = vtanh.pop %v731
    %v764 = vtanh.pop %v732
    %v765 = vtanh.pop %v733
    %v766 = vtanh.pop %v734
    %v767 = vtanh.pop %v735
    %v768 = vtanh.pop %v736
    %v769 = vtanh.pop %v737
    %v770 = vtanh.pop %v738
    %v771 = vtanh.pop %v739
    %v772 = vtanh.pop %v740
    %v773 = vtanh.pop %v741
    %v774 = vtanh.pop %v742
    %v775 = vtanh.pop %v743
    %v776 = vtanh.pop %v744
    %v777 = vtanh.pop %v745
    %v778 = vtanh.pop %v746
    %v779 = vtanh.pop %v747
    %v780 = vtanh.pop %v748
    %v781 = vadd.f32 %v749, 1.0
    %v782 = vadd.f32 %v750, 1.0
    %v783 = vadd.f32 %v751, 1.0
    %v784 = vadd.f32 %v752, 1.0
    %v785 = vadd.f32 %v753, 1.0
    %v786 = vadd.f32 %v754, 1.0
    %v787 = vadd.f32 %v755, 1.0
    %v788 = vadd.f32 %v756, 1.0
    %v789 = vadd.f32 %v757, 1.0
    %v790 = vadd.f32 %v758, 1.0
    %v791 = vadd.f32 %v759, 1.0
    %v792 = vadd.f32 %v760, 1.0
    %v793 = vadd.f32 %v761, 1.0
    %v794 = vadd.f32 %v762, 1.0
    %v795 = vadd.f32 %v763, 1.0
    %v796 = vadd.f32 %v764, 1.0
    %v797 = vadd.f32 %v765, 1.0
    %v798 = vadd.f32 %v766, 1.0
    %v799 = vadd.f32 %v767, 1.0
    %v800 = vadd.f32 %v768, 1.0
    %v801 = vadd.f32 %v769, 1.0
    %v802 = vadd.f32 %v770, 1.0
    %v803 = vadd.f32 %v771, 1.0
    %v804 = vadd.f32 %v772, 1.0
    %v805 = vadd.f32 %v773, 1.0
    %v806 = vadd.f32 %v774, 1.0
    %v807 = vadd.f32 %v775, 1.0
    %v808 = vadd.f32 %v776, 1.0
    %v809 = vadd.f32 %v777, 1.0
    %v810 = vadd.f32 %v778, 1.0
    %v811 = vadd.f32 %v779, 1.0
    %v812 = vadd.f32 %v780, 1.0
    %v813 = vmul.f32 %v557, %v781
    %v814 = vmul.f32 %v558, %v782
    %v815 = vmul.f32 %v559, %v783
    %v816 = vmul.f32 %v560, %v784
    %v817 = vmul.f32 %v561, %v785
    %v818 = vmul.f32 %v562, %v786
    %v819 = vmul.f32 %v563, %v787
    %v820 = vmul.f32 %v564, %v788
    %v821 = vmul.f32 %v565, %v789
    %v822 = vmul.f32 %v566, %v790
    %v823 = vmul.f32 %v567, %v791
    %v824 = vmul.f32 %v568, %v792
    %v825 = vmul.f32 %v569, %v793
    %v826 = vmul.f32 %v570, %v794
    %v827 = vmul.f32 %v571, %v795
    %v828 = vmul.f32 %v572, %v796
    %v829 = vmul.f32 %v573, %v797
    %v830 = vmul.f32 %v574, %v798
    %v831 = vmul.f32 %v575, %v799
    %v832 = vmul.f32 %v576, %v800
    %v833 = vmul.f32 %v577, %v801
    %v834 = vmul.f32 %v578, %v802
    %v835 = vmul.f32 %v579, %v803
    %v836 = vmul.f32 %v580, %v804
    %v837 = vmul.f32 %v581, %v805
    %v838 = vmul.f32 %v582, %v806
    %v839 = vmul.f32 %v583, %v807
    %v840 = vmul.f32 %v584, %v808
    %v841 = vmul.f32 %v585, %v809
    %v842 = vmul.f32 %v586, %v810
    %v843 = vmul.f32 %v587, %v811
    %v844 = vmul.f32 %v588, %v812
    %v845 = vld [vmem:[%s5] sm:$0xf]
    %v846 = vpack.c.bf16 %v815, %v813
    %v847 = vpack.c.bf16 %v816, %v814
    %v848 = vpack.c.bf16 %v819, %v817
    %v849 = vpack.c.bf16 %v820, %v818
    %v850 = vpack.c.bf16 %v823, %v821
    %v851 = vpack.c.bf16 %v824, %v822
    %v852 = vpack.c.bf16 %v827, %v825
    %v853 = vpack.c.bf16 %v828, %v826
    %v854 = vpack.c.bf16 %v831, %v829
    %v855 = vpack.c.bf16 %v832, %v830
    %v856 = vpack.c.bf16 %v835, %v833
    %v857 = vpack.c.bf16 %v836, %v834
    %v858 = vpack.c.bf16 %v839, %v837
    %v859 = vpack.c.bf16 %v840, %v838
    %v860 = vpack.c.bf16 %v843, %v841
    %v861 = vpack.c.bf16 %v844, %v842
    %v862 = vld [vmem:[%s6] sm:$0xff]
    %864 = vset.pattern.permute.xlu0 0
    %865 = vperm.xlu0 %864, %v862
    %v866 = vpop.permute.xlu0 %865
    %868 = vmatpush.bf16.msra.mxu0 %v860
    %869 = vmatpush.bf16.msra.mxu0 %v858
    %870 = vmatpush.bf16.msra.mxu0 %v856
    %871 = vmatpush.bf16.msra.mxu0 %v854
    %872 = vmatpush.bf16.msra.mxu0 %v852
    %873 = vmatpush.bf16.msra.mxu0 %v850
    %874 = vmatpush.bf16.msra.mxu0 %v848
    %875 = vmatpush.bf16.msra.mxu0 %v846
    %876 = vmatmul.bf16.gmra.mxu0 %v845
    %v877 = vpop.f32.mrf.mxu0
    %v878 = vadd.f32 %v866, %v877
    %v879 = vpop.f32.mrf.mxu0
    %880 = vdwg.mxu0
    %881 = vmatpush.bf16.msra.mxu0 %v861
    %882 = vmatpush.bf16.msra.mxu0 %v859
    %883 = vmatpush.bf16.msra.mxu0 %v857
    %884 = vmatpush.bf16.msra.mxu0 %v855
    %885 = vmatpush.bf16.msra.mxu0 %v853
    %886 = vmatpush.bf16.msra.mxu0 %v851
    %887 = vmatpush.bf16.msra.mxu0 %v849
    %888 = vmatpush.bf16.msra.mxu0 %v847
    %889 = vmatmul.bf16.gmra.mxu0 %v845
    %v890 = vpop.f32.mrf.mxu0
    %v891 = vadd.f32 %v866, %v890
    %v892 = vpop.f32.mrf.mxu0
    %893 = vdwg.mxu0
    %894 = vst [vmem:[#allocation2] sm:$0xff] %v878
    %895 = vst [vmem:[#allocation2 + $0x8] sm:$0xff] %v891
    // Predicated region
    $region30: #{tpu_custom_call.1} parent=1 // pred_check
      _
    $region31: #{tpu_custom_call.1} parent=1 // pred_check_branch
      %897 = sbr.rel (0) target = $region33
    $region32: #{tpu_custom_call.1} parent=1 // pred_region
      %899 = vsyncadd [#allocation3], 0
      %s901 = sshll.u32 [#allocation2], 4
      %s902 = int_to_ptr.vmem [resolvable:$true] %s901
      %s903 = sshll.u32 %s7, 4
      %s904 = int_to_ptr.hbm [resolvable:$true] %s903
      %906 = dma.vmem_to_hbm [thread:$0]  %s902, 256, %s904, [#allocation3]
    $region33: #{tpu_custom_call.1} parent=1 // pred_fallthru
      _
    // Predicated region
    $region34: #{tpu_custom_call.1} parent=1 // pred_check
      _
    $region35: #{tpu_custom_call.1} parent=1 // pred_check_branch
      %908 = sbr.rel (0) target = $region37
    $region36: #{tpu_custom_call.1} parent=1 // pred_region
      %910 = dma.done [#allocation3], 256
    $region37: #{tpu_custom_call.1} parent=1 // pred_fallthru
      _
    %911 = vsyncpa [#allocation3], 1

</llo_original>
